<compile_context>
chip_gen: v7x
topology: tpu7x:2x2x1
jax: 0.10.0
libtpu: 0.0.40
codegen_flags: <defaults>
</compile_context>

<pallas_src>
import functools

import jax
import jax.numpy as jnp
from jax.experimental import pallas as pl
from jax.experimental.pallas import tpu as pltpu


def _cdiv(a, b):
    return -(-a // b)


def _ceil_to(x, m):
    return _cdiv(x, m) * m


def _channel_attention_kernel(x_ref, w1t_ref, w2t_ref, o_ref,
                              sum_acc, max_acc, *,
                              hw_total, hw_tile, needs_mask):
    # x_ref:   (b_tile, C, hw_tile)   input spatial tile (native dtype)
    # w1t_ref: (C, Ch)                fc1 weight, pre-transposed
    # w2t_ref: (Ch, C)                fc2 weight, pre-transposed
    # o_ref:   (1, b_tile, C)         sigmoid(channel attention)
    # sum_acc: (b_tile, C, 128) f32   lane-parallel running sum
    # max_acc: (b_tile, C, 128) xdt   lane-parallel running max
    k = pl.program_id(1)
    nk = pl.num_programs(1)

    @pl.when(k == 0)
    def _init():
        sum_acc[...] = jnp.zeros_like(sum_acc)
        max_acc[...] = jnp.full_like(max_acc, -jnp.inf)

    x = x_ref[...]                          # (b_tile, C, hw_tile)
    groups = hw_tile // 128                 # lane groups per tile (static)

    def _accumulate(masked):
        s = sum_acc[...]                    # f32
        m = max_acc[...]                    # x.dtype (native bf16 OK on v6e/v7x)
        for g in range(groups):
            sl = x[:, :, g * 128:(g + 1) * 128]     # lane-tile-aligned slice
            if masked:
                lane = jax.lax.broadcasted_iota(jnp.int32, (1, 1, 128), 2)
                valid = (k * hw_tile + g * 128 + lane) < hw_total
                s = s + jnp.where(valid, sl, 0.0).astype(jnp.float32)
                m = jnp.maximum(m, jnp.where(valid, sl, -jnp.inf))
            else:
                s = s + sl.astype(jnp.float32)
                m = jnp.maximum(m, sl)
        sum_acc[...] = s
        max_acc[...] = m

    if needs_mask:
        # Only the last reduction tile can contain invalid (clipped) lanes;
        # steady-state tiles accumulate with zero masking overhead.
        @pl.when(k < nk - 1)
        def _acc_fast():
            _accumulate(False)

        @pl.when(k == nk - 1)
        def _acc_masked():
            _accumulate(True)
    else:
        _accumulate(False)

    @pl.when(k == nk - 1)
    def _epilogue():
        bt = sum_acc.shape[0]
        # One-time cross-lane reduce of the lane-parallel partials.
        avg = jnp.sum(sum_acc[...], axis=-1) * (1.0 / hw_total)      # (bt, C)
        mx = jnp.max(max_acc[...], axis=-1).astype(jnp.float32)      # (bt, C)
        # Fuse both pooled branches into a single MXU pass (shared weights).
        pooled = jnp.concatenate([avg, mx], axis=0)                  # (2bt, C)
        h = jnp.maximum(
            jnp.dot(pooled, w1t_ref[...].astype(jnp.float32),
                    preferred_element_type=jnp.float32), 0.0)        # (2bt, Ch)
        y = jnp.dot(h, w2t_ref[...].astype(jnp.float32),
                    preferred_element_type=jnp.float32)              # (2bt, C)
        out = y[:bt] + y[bt:]                                        # avg + max
        o_ref[0] = jax.nn.sigmoid(out).astype(o_ref.dtype)


def _choose_tiles(B, C, HW, itemsize, b_tile_req, hw_tile_req):
    """Budget-driven tile sizing (VMEM capacity per generation)."""
    # Guarantee >= 2 batch grid tiles whenever B >= 2 so the "parallel" axis
    # can be sharded across v7x's two TensorCores.
    b_tile = max(1, min(b_tile_req, B))
    if B >= 2 and _cdiv(B, b_tile) < 2:
        b_tile = _cdiv(B, 2)

    try:
        vmem_cap = int(pltpu.get_tpu_info().vmem_capacity_bytes)
    except Exception:
        vmem_cap = 64 << 20  # conservative (v7x per-TC)
    # ~40 MiB usable target on v7x (64 MiB physical), ~80 MiB on v5e/v6e.
    budget = min(int(vmem_cap * 0.625), 96 << 20)
    per_buf = budget // 4  # one of the two double-buffered input blocks

    row_bytes = max(1, b_tile * C * itemsize)
    if hw_tile_req is None:
        hw_target = (per_buf // row_bytes) // 128 * 128
        hw_target = max(512, min(2048, hw_target))
    else:
        hw_target = max(128, hw_tile_req // 128 * 128)

    # Minimal-padding tiling: nk roughly-equal tiles, rounded up to a lane
    # multiple (keeps wasted lanes per tile < 128 in most cases).
    nk = max(1, _cdiv(HW, hw_target))
    hw_tile = min(_ceil_to(_cdiv(HW, nk), 128), _ceil_to(HW, 128))

    # Shrink if the block would still blow the per-buffer budget.
    while hw_tile > 128 and hw_tile * row_bytes > per_buf:
        hw_tile -= 128
    while b_tile > 1 and hw_tile * b_tile * C * itemsize > per_buf:
        b_tile -= 1
    return b_tile, hw_tile, budget, vmem_cap


def channel_attention(x, w1, w2, *, hw_tile=None, b_tile=8):
    """ChannelAttention forward.

    x:  (B, C, H, W) input.
    w1: (C//16, C)   fc1 weight (Conv2d(C, C//16, 1, bias=False), squeezed).
    w2: (C, C//16)   fc2 weight (Conv2d(C//16, C, 1, bias=False), squeezed).
    Returns sigmoid(fc2(relu(fc1(avgpool(x)))) + fc2(relu(fc1(maxpool(x)))))
    with shape (B, C, 1, 1), matching the PyTorch module.
    """
    B, C, H, W = x.shape
    Ch = w1.shape[0]
    HW = H * W
    itemsize = jnp.dtype(x.dtype).itemsize

    bt, ht, budget, vmem_cap = _choose_tiles(B, C, HW, itemsize, b_tile, hw_tile)

    nb = _cdiv(B, bt)
    nk = _cdiv(HW, ht)
    needs_mask = (HW % ht) != 0

    xr = x.reshape(B, C, HW)              # free view, no HBM pad/copy
    w1t = jnp.transpose(w1)               # (C, Ch)
    w2t = jnp.transpose(w2)               # (Ch, C)

    kernel = functools.partial(
        _channel_attention_kernel,
        hw_total=HW, hw_tile=ht, needs_mask=needs_mask)

    # VMEM budget: double-buffered input blocks + single-buffered weights +
    # output + lane-parallel scratch + headroom, capped at physical capacity.
    w_itemsize = jnp.dtype(w1.dtype).itemsize
    x_blk = bt * C * ht * itemsize
    w_bytes = 2 * C * Ch * w_itemsize
    out_blk = bt * C * itemsize
    scratch_bytes = bt * C * 128 * (4 + itemsize)
    vmem_limit = 2 * x_blk + 2 * w_bytes + 2 * out_blk + scratch_bytes + (4 << 20)
    vmem_limit = int(max(16 << 20, min(vmem_limit, vmem_cap)))

    out = pl.pallas_call(
        kernel,
        out_shape=jax.ShapeDtypeStruct((nb, bt, C), x.dtype),
        grid_spec=pltpu.PrefetchScalarGridSpec(
            num_scalar_prefetch=0,
            grid=(nb, nk),
            in_specs=[
                pl.BlockSpec((bt, C, ht), lambda b, k: (b, 0, k)),
                # Constant blocks: no point double-buffering the weights.
                pl.BlockSpec((C, Ch), lambda b, k: (0, 0),
                             pipeline_mode=pl.Buffered(1)),
                pl.BlockSpec((Ch, C), lambda b, k: (0, 0),
                             pipeline_mode=pl.Buffered(1)),
            ],
            # Output block index constant across the reduction axis k ->
            # VMEM-resident across the reduction, single writeback per b tile.
            out_specs=pl.BlockSpec((1, bt, C), lambda b, k: (b, 0, 0)),
            scratch_shapes=[
                pltpu.VMEM((bt, C, 128), jnp.float32),   # running sum (f32)
                pltpu.VMEM((bt, C, 128), x.dtype),       # running max (native)
            ],
        ),
        compiler_params=pltpu.CompilerParams(
            dimension_semantics=("parallel", "arbitrary"),
            vmem_limit_bytes=vmem_limit,
        ),
    )(xr, w1t, w2t)

    return out.reshape(nb * bt, C)[:B].reshape(B, C, 1, 1)


def channel_attention_ref(x, w1, w2):
    """Pure-JAX reference mirroring the PyTorch forward."""
    avg = jnp.mean(x, axis=(2, 3))   # (B, C)
    mx = jnp.max(x, axis=(2, 3))     # (B, C)

    def branch(p):
        h = jnp.maximum(p @ w1.T, 0.0)
        return h @ w2.T

    out = jax.nn.sigmoid(branch(avg) + branch(mx))
    return out.reshape(*out.shape, 1, 1)


if __name__ == "__main__":
    # in_planes must be >= 16 because fc1 hardcodes `in_planes // 16`.
    B, C, H, W = 2, 64, 16, 16
    Ch = C // 16  # hidden channels = 4

    key = jax.random.PRNGKey(0)
    kx, k1, k2 = jax.random.split(key, 3)

    x = jax.random.normal(kx, (B, C, H, W), dtype=jnp.float32)
    # Conv2d(C, Ch, 1, bias=False) weight is (Ch, C, 1, 1) -> squeeze to (Ch, C)
    w1 = jax.random.normal(k1, (Ch, C), dtype=jnp.float32) * 0.1
    # Conv2d(Ch, C, 1, bias=False) weight is (C, Ch, 1, 1) -> squeeze to (C, Ch)
    w2 = jax.random.normal(k2, (C, Ch), dtype=jnp.float32) * 0.1

    out = jax.block_until_ready(channel_attention(x, w1, w2))
    ref = channel_attention_ref(x, w1, w2)
    assert out.shape == (B, C, 1, 1)
    assert jnp.allclose(out, ref, atol=1e-5, rtol=1e-5), (
        jnp.max(jnp.abs(out - ref)))

    # Ragged paths: HW not a multiple of the tile (masked last tile) and
    # B not a multiple of b_tile (clipped batch block), multi-tile reduction.
    B2, C2, H2, W2 = 3, 64, 25, 23   # H*W = 575
    kx2, k12, k22 = jax.random.split(jax.random.PRNGKey(1), 3)
    x2 = jax.random.normal(kx2, (B2, C2, H2, W2), dtype=jnp.float32)
    w12 = jax.random.normal(k12, (C2 // 16, C2), dtype=jnp.float32) * 0.1
    w22 = jax.random.normal(k22, (C2, C2 // 16), dtype=jnp.float32) * 0.1
    out2 = jax.block_until_ready(
        channel_attention(x2, w12, w22, hw_tile=256, b_tile=2))
    ref2 = channel_attention_ref(x2, w12, w22)
    assert out2.shape == (B2, C2, 1, 1)
    assert jnp.allclose(out2, ref2, atol=1e-5, rtol=1e-5), (
        jnp.max(jnp.abs(out2 - ref2)))

    print("KERNEL_OK")
</pallas_src>

<mosaic_0001>
module attributes {stable_mosaic.version = 11 : i64} {
  func.func @_channel_attention_kernel(%arg0: i32, %arg1: i32, %arg2: memref<1x64x256xf32, #tpu.memory_space<vmem>>, %arg3: memref<64x4xf32, #tpu.memory_space<vmem>>, %arg4: memref<4x64xf32, #tpu.memory_space<vmem>>, %arg5: memref<1x1x64xf32, #tpu.memory_space<vmem>>, %arg6: memref<1x64x128xf32, #tpu.memory_space<vmem>>, %arg7: memref<1x64x128xf32, #tpu.memory_space<vmem>>) attributes {dimension_semantics = [#tpu.dimension_semantics<parallel>, #tpu.dimension_semantics<arbitrary>], iteration_bounds = array<i64: 2, 1>, scalar_prefetch = 0 : i64, scratch_operands = 2 : i64, tpu.core_type = #tpu.core_type<tc>, window_params = [{transform_indices = @transform_0, window_bounds = array<i64: 1, 64, 256>}, {pipeline_mode = #tpu.pipeline_mode<synchronous>, transform_indices = @transform_1, window_bounds = array<i64: 64, 4>}, {pipeline_mode = #tpu.pipeline_mode<synchronous>, transform_indices = @transform_2, window_bounds = array<i64: 4, 64>}, {transform_indices = @transform_3, window_bounds = array<i64: 1, 1, 64>}]} {
    %c0_i32 = arith.constant 0 : i32
    %0 = arith.cmpi eq, %arg1, %c0_i32 : i32
    %1 = arith.extui %0 : i1 to i32
    %c0_i32_0 = arith.constant 0 : i32
    %2 = arith.cmpi ne, %1, %c0_i32_0 : i32
    scf.if %2 {
      %cst = arith.constant 0.000000e+00 : f32
      %17 = vector.broadcast %cst : f32 to vector<1x64x128xf32>
      %c0_17 = arith.constant 0 : index
      %c0_18 = arith.constant 0 : index
      %c0_19 = arith.constant 0 : index
      %18 = vector.load %arg6[%c0_17, %c0_18, %c0_19] : memref<1x64x128xf32, #tpu.memory_space<vmem>>, vector<1x64x128xf32>
      tpu.vector_store %arg6[%c0_17, %c0_18, %c0_19], %17 {strides = array<i32>} : memref<1x64x128xf32, #tpu.memory_space<vmem>>, vector<1x64x128xf32>,
      %cst_20 = arith.constant 0xFF800000 : f32
      %19 = vector.broadcast %cst_20 : f32 to vector<1x64x128xf32>
      %c0_21 = arith.constant 0 : index
      %c0_22 = arith.constant 0 : index
      %c0_23 = arith.constant 0 : index
      %20 = vector.load %arg7[%c0_21, %c0_22, %c0_23] : memref<1x64x128xf32, #tpu.memory_space<vmem>>, vector<1x64x128xf32>
      tpu.vector_store %arg7[%c0_21, %c0_22, %c0_23], %19 {strides = array<i32>} : memref<1x64x128xf32, #tpu.memory_space<vmem>>, vector<1x64x128xf32>,
    } else {
    }
    %c0 = arith.constant 0 : index
    %c0_1 = arith.constant 0 : index
    %c0_2 = arith.constant 0 : index
    %3 = vector.load %arg2[%c0, %c0_1, %c0_2] : memref<1x64x256xf32, #tpu.memory_space<vmem>>, vector<1x64x256xf32>
    %c0_3 = arith.constant 0 : index
    %c0_4 = arith.constant 0 : index
    %c0_5 = arith.constant 0 : index
    %4 = vector.load %arg6[%c0_3, %c0_4, %c0_5] : memref<1x64x128xf32, #tpu.memory_space<vmem>>, vector<1x64x128xf32>
    %c0_6 = arith.constant 0 : index
    %c0_7 = arith.constant 0 : index
    %c0_8 = arith.constant 0 : index
    %5 = vector.load %arg7[%c0_6, %c0_7, %c0_8] : memref<1x64x128xf32, #tpu.memory_space<vmem>>, vector<1x64x128xf32>
    %6 = vector.extract_strided_slice %3 {offsets = [0, 0, 0], sizes = [1, 64, 128], strides = [1, 1, 1]} : vector<1x64x256xf32> to vector<1x64x128xf32>
    %7 = arith.addf %4, %6 : vector<1x64x128xf32>
    %8 = arith.maximumf %5, %6 : vector<1x64x128xf32>
    %9 = vector.extract_strided_slice %3 {offsets = [0, 0, 128], sizes = [1, 64, 128], strides = [1, 1, 1]} : vector<1x64x256xf32> to vector<1x64x128xf32>
    %10 = arith.addf %7, %9 : vector<1x64x128xf32>
    %11 = arith.maximumf %8, %9 : vector<1x64x128xf32>
    %c0_9 = arith.constant 0 : index
    %c0_10 = arith.constant 0 : index
    %c0_11 = arith.constant 0 : index
    %12 = vector.load %arg6[%c0_9, %c0_10, %c0_11] : memref<1x64x128xf32, #tpu.memory_space<vmem>>, vector<1x64x128xf32>
    tpu.vector_store %arg6[%c0_9, %c0_10, %c0_11], %10 {strides = array<i32>} : memref<1x64x128xf32, #tpu.memory_space<vmem>>, vector<1x64x128xf32>,
    %c0_12 = arith.constant 0 : index
    %c0_13 = arith.constant 0 : index
    %c0_14 = arith.constant 0 : index
    %13 = vector.load %arg7[%c0_12, %c0_13, %c0_14] : memref<1x64x128xf32, #tpu.memory_space<vmem>>, vector<1x64x128xf32>
    tpu.vector_store %arg7[%c0_12, %c0_13, %c0_14], %11 {strides = array<i32>} : memref<1x64x128xf32, #tpu.memory_space<vmem>>, vector<1x64x128xf32>,
    %c0_i32_15 = arith.constant 0 : i32
    %14 = arith.cmpi eq, %arg1, %c0_i32_15 : i32
    %15 = arith.extui %14 : i1 to i32
    %c0_i32_16 = arith.constant 0 : i32
    %16 = arith.cmpi ne, %15, %c0_i32_16 : i32
    scf.if %16 {
      %c0_17 = arith.constant 0 : index
      %c0_18 = arith.constant 0 : index
      %c0_19 = arith.constant 0 : index
      %17 = vector.load %arg6[%c0_17, %c0_18, %c0_19] : memref<1x64x128xf32, #tpu.memory_space<vmem>>, vector<1x64x128xf32>
      %cst = arith.constant dense<0.000000e+00> : vector<1x64xf32>
      %18 = vector.multi_reduction <add>, %17, %cst [2] : vector<1x64x128xf32> to vector<1x64xf32>
      %cst_20 = arith.constant 3.906250e-03 : f32
      %19 = vector.broadcast %cst_20 : f32 to vector<1x64xf32>
      %20 = arith.mulf %18, %19 : vector<1x64xf32>
      %c0_21 = arith.constant 0 : index
      %c0_22 = arith.constant 0 : index
      %c0_23 = arith.constant 0 : index
      %21 = vector.load %arg7[%c0_21, %c0_22, %c0_23] : memref<1x64x128xf32, #tpu.memory_space<vmem>>, vector<1x64x128xf32>
      %cst_24 = arith.constant dense<0xFF800000> : vector<1x64xf32>
      %22 = vector.multi_reduction <maximumf>, %21, %cst_24 [2] : vector<1x64x128xf32> to vector<1x64xf32>
      %23 = tpu.concatenate %20, %22 in 0 : vector<1x64xf32>, vector<1x64xf32> -> vector<2x64xf32>
      %c0_25 = arith.constant 0 : index
      %c0_26 = arith.constant 0 : index
      %24 = vector.load %arg3[%c0_25, %c0_26] : memref<64x4xf32, #tpu.memory_space<vmem>>, vector<64x4xf32>
      %cst_27 = arith.constant dense<0.000000e+00> : vector<2x4xf32>
      %25 = tpu.matmul %23, %24, %cst_27 {dimension_numbers = #tpu.dot_dimension_numbers<[1], [0], [0], [1], [0, 0, 1, 1], [], []>} : vector<2x64xf32>, vector<64x4xf32>, vector<2x4xf32> -> vector<2x4xf32>
      %cst_28 = arith.constant 0.000000e+00 : f32
      %26 = vector.broadcast %cst_28 : f32 to vector<2x4xf32>
      %27 = arith.maximumf %25, %26 : vector<2x4xf32>
      %c0_29 = arith.constant 0 : index
      %c0_30 = arith.constant 0 : index
      %28 = vector.load %arg4[%c0_29, %c0_30] : memref<4x64xf32, #tpu.memory_space<vmem>>, vector<4x64xf32>
      %cst_31 = arith.constant dense<0.000000e+00> : vector<2x64xf32>
      %29 = tpu.matmul %27, %28, %cst_31 {dimension_numbers = #tpu.dot_dimension_numbers<[1], [0], [0], [1], [0, 0, 1, 1], [], []>} : vector<2x4xf32>, vector<4x64xf32>, vector<2x64xf32> -> vector<2x64xf32>
      %30 = vector.extract_strided_slice %29 {offsets = [0, 0], sizes = [1, 64], strides = [1, 1]} : vector<2x64xf32> to vector<1x64xf32>
      %31 = vector.extract_strided_slice %29 {offsets = [1, 0], sizes = [1, 64], strides = [1, 1]} : vector<2x64xf32> to vector<1x64xf32>
      %32 = arith.addf %30, %31 : vector<1x64xf32>
      %33 = arith.negf %32 : vector<1x64xf32>
      %34 = math.exp %33 : vector<1x64xf32>
      %cst_32 = arith.constant 1.000000e+00 : f32
      %35 = vector.broadcast %cst_32 : f32 to vector<1x64xf32>
      %36 = arith.addf %35, %34 : vector<1x64xf32>
      %37 = arith.divf %35, %36 : vector<1x64xf32>
      %c0_33 = arith.constant 0 : index
      %c0_34 = arith.constant 0 : index
      %c0_35 = arith.constant 0 : index
      %38 = vector.load %arg5[%c0_33, %c0_34, %c0_35] : memref<1x1x64xf32, #tpu.memory_space<vmem>>, vector<1x1x64xf32>
      %39 = vector.shape_cast %38 : vector<1x1x64xf32> to vector<1x64xf32>
      %40 = vector.shape_cast %37 : vector<1x64xf32> to vector<1x1x64xf32>
      tpu.vector_store %arg5[%c0_33, %c0_34, %c0_35], %40 {strides = array<i32>} : memref<1x1x64xf32, #tpu.memory_space<vmem>>, vector<1x1x64xf32>,
    } else {
    }
    return
  }
  func.func @transform_0(%arg0: i32, %arg1: i32) -> (i32, i32, i32) {
    %c0_i32 = arith.constant 0 : i32
    %c0_i32_0 = arith.constant 0 : i32
    return %arg0, %c0_i32, %arg1 : i32, i32, i32
  }
  func.func @transform_1(%arg0: i32, %arg1: i32) -> (i32, i32) {
    %c0_i32 = arith.constant 0 : i32
    %c0_i32_0 = arith.constant 0 : i32
    %c0_i32_1 = arith.constant 0 : i32
    return %c0_i32, %c0_i32_0 : i32, i32
  }
  func.func @transform_2(%arg0: i32, %arg1: i32) -> (i32, i32) {
    %c0_i32 = arith.constant 0 : i32
    %c0_i32_0 = arith.constant 0 : i32
    %c0_i32_1 = arith.constant 0 : i32
    return %c0_i32, %c0_i32_0 : i32, i32
  }
  func.func @transform_3(%arg0: i32, %arg1: i32) -> (i32, i32, i32) {
    %c0_i32 = arith.constant 0 : i32
    %c0_i32_0 = arith.constant 0 : i32
    %c0_i32_1 = arith.constant 0 : i32
    return %arg0, %c0_i32, %c0_i32_0 : i32, i32, i32
  }
}

</mosaic_0001>

<llo_original>
// kernel: tpu_custom_call.1
$region0: #{tpu_custom_call.1}
  #allocation0 [shape = 'u32[]', space=smem, size = 0x4, offset = 0x4, fixed_abs, tag = 'smem constant byte address 0x4 - core index']
  #allocation1 [shape = 'u32[144,128]{1,0:T(1,128)}', space=vmem, size = 0x12000, scoped, tag = 'internal scratch']
  #allocation2 [shape = 'f32[1,64,128]{2,1,0:T(8,128)}', space=vmem, size = 0x8000, scoped, tag = 'scratch operand']
  #allocation3 [shape = 'f32[1,64,128]{2,1,0:T(8,128)}', space=vmem, size = 0x8000, scoped, tag = 'scratch operand']
  %s0 = inlined_call_operand.hbm [shape: f32[2,64,256], index: 0, kind: input, shape index: {}]
  %s1 = inlined_call_operand.vmem [shape: f32[64,4], index: 1, kind: input, shape index: {}]
  %s2 = inlined_call_operand.vmem [shape: f32[4,64], index: 2, kind: input, shape index: {}]
  %s3 = inlined_call_operand.hbm [shape: f32[2,1,64], index: 3, kind: output, shape index: {}]
  %s4 = sld [smem:[#allocation0]]
  $region57: #{tpu_custom_call.1} parent=0
    _
  %s6 = ssub.s32 1, %s4
  %s7 = scalar_select 0, %s6, %s4
  $region1: #{tpu_custom_call.1} parent=0
    #allocation4 [shape = 'u8[131072]{0}', space=vmem, size = 0x20000, scoped, tag = 'input window, operand 0']
    #allocation5 [shape = 's32[2]{0}', space=sflag, size = 0x8, scoped, tag = 'scoped memory for tpu_custom_call.1']
    #allocation6 [shape = 's32[2]{0}', space=sflag, size = 0x8, scoped, tag = 'scoped memory for tpu_custom_call.1']
    #allocation7 [shape = 'u8[1024]{0}', space=vmem, size = 0x400, scoped, tag = 'output window, operand 0']
    %8 = vsyncpa [#allocation5], 0
    %s9 = scalar_lea.sflag [#allocation5], 1
    %10 = vsyncpa %s9, 0
    %11 = vsyncpa [#allocation6], 0
    %s12 = scalar_lea.sflag [#allocation6], 1
    %13 = vsyncpa %s12, 0
    loop: start=0, step=1, limit=4
    $region2: #{tpu_custom_call.1} parent=1 // loop_pre_header
      _
    $region3: #{tpu_custom_call.1} parent=1 // loop_header
      %s15 = sphi 0, %s19
      %p16 = scmp.ge.s32.totalorder %s15, 4
      %s22 = sphi 0, %s34
      %s23 = sphi 0, %s30
      %s24 = sphi 0, %s22
      %s25 = sphi 0, %s23
      %s26 = sphi 0, %s24
      %s27 = sphi 0, %s25
      %s39 = sphi 0, %s41
      %s42 = sphi 0, %s39
      %s43 = sphi 0, %s42
      %s59 = sphi 0, %s43
      %s63 = sphi 0, %s63
      %s65 = sphi 0, %s63
      %s66 = sphi 0, %s65
      %s80 = sphi 0, %s66
      %s84 = sphi 0, %s84
      %s86 = sphi 0, %s84
      %s87 = sphi 0, %s86
      %s101 = sphi 0, %s87
      %s107 = sphi 0, %s109
      %s110 = sphi 0, %s107
      %s111 = sphi 0, %s110
      %s127 = sphi 0, %s111
    $region4: #{tpu_custom_call.1} parent=1 // loop_header_branch
      %18 = sbr.rel (%p16) target = $region8
    $region5: #{tpu_custom_call.1} parent=1 // loop_body
      %s20 = ssub.s32 %s15, 1
      %s21 = ssub.s32 %s15, 2
      %s28 = sadd.s32 1, %s23
      %p29 = scmp.ge.s32.totalorder %s28, 1
      %s30 = scalar_select %p29, 0, %s28
      %s31 = sadd.s32 1, %s22
      %s32 = scalar_select %p29, %s31, %s22
      %p33 = scmp.ge.s32.totalorder %s32, 2
      %s34 = scalar_select %p33, 0, %s32
      %s35 = ssub.s32 %s22, %s34
      %s36 = ssub.s32 %s23, %s30
      %s37 = sor.u32 %s35, %s36
      %p38 = scmp.eq.s32.totalorder %s37, 0
      %s40 = sadd.s32 %s39, 1
      %s41 = scalar_select %p38, %s39, %s40
      %p44 = pneg %p38
      %p45 = scmp.eq.s32.totalorder %s15, 1
      %p46 = por %p44, %p45
      %p47 = scmp.ne.s32.totalorder %s39, %s42
      %p48 = scmp.eq.s32.totalorder %s15, 0
      %p49 = por %p47, %p48
      %p50 = scmp.ne.s32.totalorder %s39, %s42
      %p51 = scmp.eq.s32.totalorder %s20, 1
      %p52 = por %p50, %p51
      %p53 = scmp.ne.s32.totalorder %s42, %s43
      %p54 = scmp.eq.s32.totalorder %s20, 0
      %p55 = por %p53, %p54
      %p56 = scmp.ne.s32.totalorder %s42, %s43
      %p57 = scmp.eq.s32.totalorder %s21, 1
      %p58 = por %p56, %p57
      %p60 = scmp.ne.s32.totalorder %s43, %s59
      %p61 = scmp.eq.s32.totalorder %s21, 0
      %p62 = por %p60, %p61
      %s64 = sadd.s32 %s63, 1
      %p67 = scmp.eq.s32.totalorder %s15, 1
      %p68 = scmp.ne.s32.totalorder %s63, %s65
      %p69 = scmp.eq.s32.totalorder %s15, 0
      %p70 = por %p68, %p69
      %p71 = scmp.ne.s32.totalorder %s63, %s65
      %p72 = scmp.eq.s32.totalorder %s20, 1
      %p73 = por %p71, %p72
      %p74 = scmp.ne.s32.totalorder %s65, %s66
      %p75 = scmp.eq.s32.totalorder %s20, 0
      %p76 = por %p74, %p75
      %p77 = scmp.ne.s32.totalorder %s65, %s66
      %p78 = scmp.eq.s32.totalorder %s21, 1
      %p79 = por %p77, %p78
      %p81 = scmp.ne.s32.totalorder %s66, %s80
      %p82 = scmp.eq.s32.totalorder %s21, 0
      %p83 = por %p81, %p82
      %s85 = sadd.s32 %s84, 1
      %p88 = scmp.eq.s32.totalorder %s15, 1
      %p89 = scmp.ne.s32.totalorder %s84, %s86
      %p90 = scmp.eq.s32.totalorder %s15, 0
      %p91 = por %p89, %p90
      %p92 = scmp.ne.s32.totalorder %s84, %s86
      %p93 = scmp.eq.s32.totalorder %s20, 1
      %p94 = por %p92, %p93
      %p95 = scmp.ne.s32.totalorder %s86, %s87
      %p96 = scmp.eq.s32.totalorder %s20, 0
      %p97 = por %p95, %p96
      %p98 = scmp.ne.s32.totalorder %s86, %s87
      %p99 = scmp.eq.s32.totalorder %s21, 1
      %p100 = por %p98, %p99
      %p102 = scmp.ne.s32.totalorder %s87, %s101
      %p103 = scmp.eq.s32.totalorder %s21, 0
      %p104 = por %p102, %p103
      %s105 = ssub.s32 %s22, %s34
      %p106 = scmp.eq.s32.totalorder %s105, 0
      %s108 = sadd.s32 %s107, 1
      %s109 = scalar_select %p106, %s107, %s108
      %p112 = pneg %p106
      %p113 = scmp.eq.s32.totalorder %s15, 1
      %p114 = por %p112, %p113
      %p115 = scmp.ne.s32.totalorder %s107, %s110
      %p116 = scmp.eq.s32.totalorder %s15, 0
      %p117 = por %p115, %p116
      %p118 = scmp.ne.s32.totalorder %s107, %s110
      %p119 = scmp.eq.s32.totalorder %s20, 1
      %p120 = por %p118, %p119
      %p121 = scmp.ne.s32.totalorder %s110, %s111
      %p122 = scmp.eq.s32.totalorder %s20, 0
      %p123 = por %p121, %p122
      %p124 = scmp.ne.s32.totalorder %s110, %s111
      %p125 = scmp.eq.s32.totalorder %s21, 1
      %p126 = por %p124, %p125
      %p128 = scmp.ne.s32.totalorder %s111, %s127
      %p129 = scmp.eq.s32.totalorder %s21, 0
      %p130 = por %p128, %p129
      %p131 = scmp.le.s32.totalorder 1, %s15
      %p132 = scmp.lt.s32.totalorder %s15, 3
      %p133 = pnand %p131, %p132
      %p134 = pneg %p133
      // Predicated region
      $region9: #{tpu_custom_call.1} parent=5 // pred_check
        _
      $region10: #{tpu_custom_call.1} parent=5 // pred_check_branch
        %136 = sbr.rel (%p133) target = $region12
      $region11: #{tpu_custom_call.1} parent=5 // pred_region
        %s137 = ssub.s32 %s15, 1
        // Predicated region
        $region13: #{tpu_custom_call.1} parent=11 // pred_check
          %p138 = pneg %p76
        $region14: #{tpu_custom_call.1} parent=11 // pred_check_branch
          %140 = sbr.rel (%p138) target = $region16
        $region15: #{tpu_custom_call.1} parent=11 // pred_region
          _
        $region16: #{tpu_custom_call.1} parent=11 // pred_fallthru
          _
        // Predicated region
        $region17: #{tpu_custom_call.1} parent=11 // pred_check
          %p141 = pneg %p97
        $region18: #{tpu_custom_call.1} parent=11 // pred_check_branch
          %143 = sbr.rel (%p141) target = $region20
        $region19: #{tpu_custom_call.1} parent=11 // pred_region
          _
        $region20: #{tpu_custom_call.1} parent=11 // pred_fallthru
          _
      $region12: #{tpu_custom_call.1} parent=5 // pred_fallthru
        _
      %p144 = scmp.lt.s32.totalorder %s15, 2
      // Predicated region
      $region21: #{tpu_custom_call.1} parent=5 // pred_check
        %p145 = pneg %p144
      $region22: #{tpu_custom_call.1} parent=5 // pred_check_branch
        %147 = sbr.rel (%p145) target = $region24
      $region23: #{tpu_custom_call.1} parent=5 // pred_region
        // Predicated region
        $region25: #{tpu_custom_call.1} parent=23 // pred_check
          %p148 = pneg %p49
        $region26: #{tpu_custom_call.1} parent=23 // pred_check_branch
          %150 = sbr.rel (%p148) target = $region28
        $region27: #{tpu_custom_call.1} parent=23 // pred_region
          %s151 = sand.u32 %s39, 1
          %s152 = scalar_lea.sflag [#allocation5], %s151
          %s153 = sand.u32 %s39, 1
          %s154 = smul.addr %s153, 128
          %s155 = scalar_lea.vmem [#allocation4], %s154
          %s156 = smul.u32 2, %s23
          %s158 = ssub.s32 2048, 2048
          %159 = vsyncadd %s152, %s158
          %s160 = smul.addr %s22, 16
          %s161 = sadd.s32 %s156, %s160
          %s162 = smul.addr %s161, 128
          %s163 = scalar_lea.hbm %s0, %s162
          %s164 = sshll.u32 %s155, 4
          %s165 = int_to_ptr.vmem [resolvable:$true] %s164
          %170 = dma.hbm_to_vmem [thread:$0]  %s163, 2048, %s165, %s152, 256, 256, 16
        $region28: #{tpu_custom_call.1} parent=23 // pred_fallthru
          _
      $region24: #{tpu_custom_call.1} parent=5 // pred_fallthru
        _
      %p171 = scmp.le.s32.totalorder 1, %s15
      %p172 = scmp.lt.s32.totalorder %s15, 3
      %p173 = pnand %p171, %p172
      %p174 = pneg %p173
      // Predicated region
      $region29: #{tpu_custom_call.1} parent=5 // pred_check
        _
      $region30: #{tpu_custom_call.1} parent=5 // pred_check_branch
        %176 = sbr.rel (%p173) target = $region32
      $region31: #{tpu_custom_call.1} parent=5 // pred_region
        %s177 = ssub.s32 %s15, 1
        %s178 = sand.u32 %s42, 1
        %s179 = scalar_lea.sflag [#allocation5], %s178
        %s180 = sand.u32 %s42, 1
        %s181 = smul.addr %s180, 128
        %s182 = scalar_lea.vmem [#allocation4], %s181
        // Predicated region
        $region33: #{tpu_custom_call.1} parent=31 // pred_check
          %p183 = pneg %p55
        $region34: #{tpu_custom_call.1} parent=31 // pred_check_branch
          %185 = sbr.rel (%p183) target = $region36
        $region35: #{tpu_custom_call.1} parent=31 // pred_region
          %186 = dma.done %s179, 2048
        $region36: #{tpu_custom_call.1} parent=31 // pred_fallthru
          _
        %s187 = sand.u32 %s42, 1
        %s188 = scalar_lea.sflag [#allocation5], %s187
        %s189 = sand.u32 %s42, 1
        %s190 = smul.addr %s189, 128
        %s191 = scalar_lea.vmem [#allocation4], %s190
        %p192 = pneg %p55
        %p193 = pneg %p52
        %p194 = pneg %p76
        %p195 = pneg %p73
        %p196 = pneg %p97
        %p197 = pneg %p94
        %p198 = pneg %p123
        %p199 = pneg %p120
        %s200 = sand.u32 %s110, 1
        %s201 = scalar_lea.sflag [#allocation6], %s200
        %s202 = sand.u32 %s110, 1
        %s203 = scalar_lea.vmem [#allocation7], %s202
        %s204 = smul.u32 2, %s25
        %p205 = scmp.eq.s32.totalorder %s25, 0
        // Predicated region
        $region37: #{tpu_custom_call.1} parent=31 // pred_check
          %p206 = pneg %p205
        $region38: #{tpu_custom_call.1} parent=31 // pred_check_branch
          %208 = sbr.rel (%p206) target = $region40
        $region39: #{tpu_custom_call.1} parent=31 // pred_region
          %209 = vst [vmem:[#allocation2] sm:$0xff] 0.0
          %210 = vst [vmem:[#allocation2 + $0x8] sm:$0xff] 0.0
          %211 = vst [vmem:[#allocation2 + $0x10] sm:$0xff] 0.0
          %212 = vst [vmem:[#allocation2 + $0x18] sm:$0xff] 0.0
          %213 = vst [vmem:[#allocation2 + $0x20] sm:$0xff] 0.0
          %214 = vst [vmem:[#allocation2 + $0x28] sm:$0xff] 0.0
          %215 = vst [vmem:[#allocation2 + $0x30] sm:$0xff] 0.0
          %216 = vst [vmem:[#allocation2 + $0x38] sm:$0xff] 0.0
          %217 = vst [vmem:[#allocation3] sm:$0xff] -inf
          %218 = vst [vmem:[#allocation3 + $0x8] sm:$0xff] -inf
          %219 = vst [vmem:[#allocation3 + $0x10] sm:$0xff] -inf
          %220 = vst [vmem:[#allocation3 + $0x18] sm:$0xff] -inf
          %221 = vst [vmem:[#allocation3 + $0x20] sm:$0xff] -inf
          %222 = vst [vmem:[#allocation3 + $0x28] sm:$0xff] -inf
          %223 = vst [vmem:[#allocation3 + $0x30] sm:$0xff] -inf
          %224 = vst [vmem:[#allocation3 + $0x38] sm:$0xff] -inf
        $region40: #{tpu_custom_call.1} parent=31 // pred_fallthru
          _
        %v225 = vld [vmem:[%s182] sm:$0xff]
        %v226 = vld [vmem:[%s182 + $0x8] sm:$0xff]
        %v227 = vld [vmem:[%s182 + $0x10] sm:$0xff]
        %v228 = vld [vmem:[%s182 + $0x18] sm:$0xff]
        %v229 = vld [vmem:[%s182 + $0x20] sm:$0xff]
        %v230 = vld [vmem:[%s182 + $0x28] sm:$0xff]
        %v231 = vld [vmem:[%s182 + $0x30] sm:$0xff]
        %v232 = vld [vmem:[%s182 + $0x38] sm:$0xff]
        %v233 = vld [vmem:[%s182 + $0x40] sm:$0xff]
        %v234 = vld [vmem:[%s182 + $0x48] sm:$0xff]
        %v235 = vld [vmem:[%s182 + $0x50] sm:$0xff]
        %v236 = vld [vmem:[%s182 + $0x58] sm:$0xff]
        %v237 = vld [vmem:[%s182 + $0x60] sm:$0xff]
        %v238 = vld [vmem:[%s182 + $0x68] sm:$0xff]
        %v239 = vld [vmem:[%s182 + $0x70] sm:$0xff]
        %v240 = vld [vmem:[%s182 + $0x78] sm:$0xff]
        %v241 = vld [vmem:[#allocation2] sm:$0xff]
        %v242 = vld [vmem:[#allocation2 + $0x8] sm:$0xff]
        %v243 = vld [vmem:[#allocation2 + $0x10] sm:$0xff]
        %v244 = vld [vmem:[#allocation2 + $0x18] sm:$0xff]
        %v245 = vld [vmem:[#allocation2 + $0x20] sm:$0xff]
        %v246 = vld [vmem:[#allocation2 + $0x28] sm:$0xff]
        %v247 = vld [vmem:[#allocation2 + $0x30] sm:$0xff]
        %v248 = vld [vmem:[#allocation2 + $0x38] sm:$0xff]
        %v249 = vld [vmem:[#allocation3] sm:$0xff]
        %v250 = vld [vmem:[#allocation3 + $0x8] sm:$0xff]
        %v251 = vld [vmem:[#allocation3 + $0x10] sm:$0xff]
        %v252 = vld [vmem:[#allocation3 + $0x18] sm:$0xff]
        %v253 = vld [vmem:[#allocation3 + $0x20] sm:$0xff]
        %v254 = vld [vmem:[#allocation3 + $0x28] sm:$0xff]
        %v255 = vld [vmem:[#allocation3 + $0x30] sm:$0xff]
        %v256 = vld [vmem:[#allocation3 + $0x38] sm:$0xff]
        %v257 = vadd.f32 %v241, %v225
        %v258 = vadd.f32 %v242, %v227
        %v259 = vadd.f32 %v243, %v229
        %v260 = vadd.f32 %v244, %v231
        %v261 = vadd.f32 %v245, %v233
        %v262 = vadd.f32 %v246, %v235
        %v263 = vadd.f32 %v247, %v237
        %v264 = vadd.f32 %v248, %v239
        %v265 = vmax.f32 %v249, %v225
        %v266 = vmax.f32 %v250, %v227
        %v267 = vmax.f32 %v251, %v229
        %v268 = vmax.f32 %v252, %v231
        %v269 = vmax.f32 %v253, %v233
        %v270 = vmax.f32 %v254, %v235
        %v271 = vmax.f32 %v255, %v237
        %v272 = vmax.f32 %v256, %v239
        %v273 = vadd.f32 %v257, %v226
        %v274 = vadd.f32 %v258, %v228
        %v275 = vadd.f32 %v259, %v230
        %v276 = vadd.f32 %v260, %v232
        %v277 = vadd.f32 %v261, %v234
        %v278 = vadd.f32 %v262, %v236
        %v279 = vadd.f32 %v263, %v238
        %v280 = vadd.f32 %v264, %v240
        %v281 = vmax.f32 %v265, %v226
        %v282 = vmax.f32 %v266, %v228
        %v283 = vmax.f32 %v267, %v230
        %v284 = vmax.f32 %v268, %v232
        %v285 = vmax.f32 %v269, %v234
        %v286 = vmax.f32 %v270, %v236
        %v287 = vmax.f32 %v271, %v238
        %v288 = vmax.f32 %v272, %v240
        %289 = vst [vmem:[#allocation2] sm:$0xff] %v273
        %290 = vst [vmem:[#allocation2 + $0x8] sm:$0xff] %v274
        %291 = vst [vmem:[#allocation2 + $0x10] sm:$0xff] %v275
        %292 = vst [vmem:[#allocation2 + $0x18] sm:$0xff] %v276
        %293 = vst [vmem:[#allocation2 + $0x20] sm:$0xff] %v277
        %294 = vst [vmem:[#allocation2 + $0x28] sm:$0xff] %v278
        %295 = vst [vmem:[#allocation2 + $0x30] sm:$0xff] %v279
        %296 = vst [vmem:[#allocation2 + $0x38] sm:$0xff] %v280
        %297 = vst [vmem:[#allocation3] sm:$0xff] %v281
        %298 = vst [vmem:[#allocation3 + $0x8] sm:$0xff] %v282
        %299 = vst [vmem:[#allocation3 + $0x10] sm:$0xff] %v283
        %300 = vst [vmem:[#allocation3 + $0x18] sm:$0xff] %v284
        %301 = vst [vmem:[#allocation3 + $0x20] sm:$0xff] %v285
        %302 = vst [vmem:[#allocation3 + $0x28] sm:$0xff] %v286
        %303 = vst [vmem:[#allocation3 + $0x30] sm:$0xff] %v287
        %304 = vst [vmem:[#allocation3 + $0x38] sm:$0xff] %v288
        // Predicated region
        $region41: #{tpu_custom_call.1} parent=31 // pred_check
          %p305 = pneg %p205
        $region42: #{tpu_custom_call.1} parent=31 // pred_check_branch
          %307 = sbr.rel (%p305) target = $region44
        $region43: #{tpu_custom_call.1} parent=31 // pred_region
          %v308 = vld [vmem:[#allocation2] sm:$0xff]
          %v309 = vld [vmem:[#allocation2 + $0x8] sm:$0xff]
          %v310 = vld [vmem:[#allocation2 + $0x10] sm:$0xff]
          %v311 = vld [vmem:[#allocation2 + $0x18] sm:$0xff]
          %v312 = vld [vmem:[#allocation2 + $0x20] sm:$0xff]
          %v313 = vld [vmem:[#allocation2 + $0x28] sm:$0xff]
          %v314 = vld [vmem:[#allocation2 + $0x30] sm:$0xff]
          %v315 = vld [vmem:[#allocation2 + $0x38] sm:$0xff]
          %316 = vadd.xlane.f32.xlu0 %v308
          %v317 = vpop.xlane.xlu0 %316
          %318 = vadd.xlane.f32.xlu0 %v309
          %v319 = vpop.xlane.xlu0 %318
          %320 = vadd.xlane.f32.xlu0 %v310
          %v321 = vpop.xlane.xlu0 %320
          %322 = vadd.xlane.f32.xlu0 %v311
          %v323 = vpop.xlane.xlu0 %322
          %324 = vadd.xlane.f32.xlu0 %v312
          %v325 = vpop.xlane.xlu0 %324
          %326 = vadd.xlane.f32.xlu0 %v313
          %v327 = vpop.xlane.xlu0 %326
          %328 = vadd.xlane.f32.xlu0 %v314
          %v329 = vpop.xlane.xlu0 %328
          %330 = vadd.xlane.f32.xlu0 %v315
          %v331 = vpop.xlane.xlu0 %330
          %v332 = vmul.f32 %v317, 0.00390625
          %v333 = vmul.f32 %v319, 0.00390625
          %v334 = vmul.f32 %v321, 0.00390625
          %v335 = vmul.f32 %v323, 0.00390625
          %v336 = vmul.f32 %v325, 0.00390625
          %v337 = vmul.f32 %v327, 0.00390625
          %v338 = vmul.f32 %v329, 0.00390625
          %v339 = vmul.f32 %v331, 0.00390625
          %v340 = vld [vmem:[#allocation3] sm:$0xff]
          %v341 = vld [vmem:[#allocation3 + $0x8] sm:$0xff]
          %v342 = vld [vmem:[#allocation3 + $0x10] sm:$0xff]
          %v343 = vld [vmem:[#allocation3 + $0x18] sm:$0xff]
          %v344 = vld [vmem:[#allocation3 + $0x20] sm:$0xff]
          %v345 = vld [vmem:[#allocation3 + $0x28] sm:$0xff]
          %v346 = vld [vmem:[#allocation3 + $0x30] sm:$0xff]
          %v347 = vld [vmem:[#allocation3 + $0x38] sm:$0xff]
          %348 = vmax.xlane.f32.xlu0 %v340
          %v349 = vpop.xlane.xlu0 %348
          %350 = vmax.xlane.f32.xlu0 %v341
          %v351 = vpop.xlane.xlu0 %350
          %352 = vmax.xlane.f32.xlu0 %v342
          %v353 = vpop.xlane.xlu0 %352
          %354 = vmax.xlane.f32.xlu0 %v343
          %v355 = vpop.xlane.xlu0 %354
          %356 = vmax.xlane.f32.xlu0 %v344
          %v357 = vpop.xlane.xlu0 %356
          %358 = vmax.xlane.f32.xlu0 %v345
          %v359 = vpop.xlane.xlu0 %358
          %360 = vmax.xlane.f32.xlu0 %v346
          %v361 = vpop.xlane.xlu0 %360
          %362 = vmax.xlane.f32.xlu0 %v347
          %v363 = vpop.xlane.xlu0 %362
          %v372 = vlaneseq
          %v373 = vand.u32 %v372, 127
          %v374 = vlaneseq
          %v375 = vshrl.u32 %v374, 7
          %v376 = vsub.s32 %v373, %v375
          %v377 = vrot.slane %v332, %v376
          %v378 = vadd.s32 %v373, 4294967288
          %v379 = vlaneseq
          %v380 = vshrl.u32 %v379, 7
          %v381 = vsub.s32 %v378, %v380
          %v382 = vrot.slane %v333, %v381
          %vm383 = vcmask 130112
          %v384 = vsel %vm383, %v382, %v377
          %v385 = vadd.s32 %v373, 4294967280
          %v386 = vlaneseq
          %v387 = vshrl.u32 %v386, 7
          %v388 = vsub.s32 %v385, %v387
          %v389 = vrot.slane %v334, %v388
          %vm390 = vcmask 195712
          %v391 = vsel %vm390, %v389, %v384
          %v392 = vadd.s32 %v373, 4294967272
          %v393 = vlaneseq
          %v394 = vshrl.u32 %v393, 7
          %v395 = vsub.s32 %v392, %v394
          %v396 = vrot.slane %v335, %v395
          %vm397 = vcmask 261312
          %v398 = vsel %vm397, %v396, %v391
          %v399 = vadd.s32 %v373, 4294967264
          %v400 = vlaneseq
          %v401 = vshrl.u32 %v400, 7
          %v402 = vsub.s32 %v399, %v401
          %v403 = vrot.slane %v336, %v402
          %vm404 = vcmask 326912
          %v405 = vsel %vm404, %v403, %v398
          %v406 = vadd.s32 %v373, 4294967256
          %v407 = vlaneseq
          %v408 = vshrl.u32 %v407, 7
          %v409 = vsub.s32 %v406, %v408
          %v410 = vrot.slane %v337, %v409
          %vm411 = vcmask 392512
          %v412 = vsel %vm411, %v410, %v405
          %v413 = vadd.s32 %v373, 4294967248
          %v414 = vlaneseq
          %v415 = vshrl.u32 %v414, 7
          %v416 = vsub.s32 %v413, %v415
          %v417 = vrot.slane %v338, %v416
          %vm418 = vcmask 458112
          %v419 = vsel %vm418, %v417, %v412
          %v420 = vadd.s32 %v373, 4294967240
          %v421 = vlaneseq
          %v422 = vshrl.u32 %v421, 7
          %v423 = vsub.s32 %v420, %v422
          %v424 = vrot.slane %v339, %v423
          %vm425 = vcmask 523712
          %v426 = vsel %vm425, %v424, %v419
          %v436 = vlaneseq
          %v437 = vshrl.u32 %v436, 7
          %v438 = vsub.s32 %v373, %v437
          %v439 = vrot.slane %v349, %v438
          %v440 = vlaneseq
          %v441 = vshrl.u32 %v440, 7
          %v442 = vsub.s32 %v378, %v441
          %v443 = vrot.slane %v351, %v442
          %v444 = vsel %vm383, %v443, %v439
          %v445 = vlaneseq
          %v446 = vshrl.u32 %v445, 7
          %v447 = vsub.s32 %v385, %v446
          %v448 = vrot.slane %v353, %v447
          %v449 = vsel %vm390, %v448, %v444
          %v450 = vlaneseq
          %v451 = vshrl.u32 %v450, 7
          %v452 = vsub.s32 %v392, %v451
          %v453 = vrot.slane %v355, %v452
          %v454 = vsel %vm397, %v453, %v449
          %v455 = vlaneseq
          %v456 = vshrl.u32 %v455, 7
          %v457 = vsub.s32 %v399, %v456
          %v458 = vrot.slane %v357, %v457
          %v459 = vsel %vm404, %v458, %v454
          %v460 = vlaneseq
          %v461 = vshrl.u32 %v460, 7
          %v462 = vsub.s32 %v406, %v461
          %v463 = vrot.slane %v359, %v462
          %v464 = vsel %vm411, %v463, %v459
          %v465 = vlaneseq
          %v466 = vshrl.u32 %v465, 7
          %v467 = vsub.s32 %v413, %v466
          %v468 = vrot.slane %v361, %v467
          %v469 = vsel %vm418, %v468, %v464
          %v470 = vlaneseq
          %v471 = vshrl.u32 %v470, 7
          %v472 = vsub.s32 %v420, %v471
          %v473 = vrot.slane %v363, %v472
          %v474 = vsel %vm425, %v473, %v469
          %vm476 = vcmask 1040384
          %v477 = vsel %vm476, %v426, %v474
          %v478 = vld [vmem:[%s1] sm:$0xff]
          %v479 = vld [vmem:[%s1 + $0x8] sm:$0xff]
          %v480 = vld [vmem:[%s1 + $0x10] sm:$0xff]
          %v481 = vld [vmem:[%s1 + $0x18] sm:$0xff]
          %v482 = vld [vmem:[%s1 + $0x20] sm:$0xff]
          %v483 = vld [vmem:[%s1 + $0x28] sm:$0xff]
          %v484 = vld [vmem:[%s1 + $0x30] sm:$0xff]
          %v485 = vld [vmem:[%s1 + $0x38] sm:$0xff]
          %vm486 = vcmask 523264
          %v488 = vsel %vm486, %v477, 0
          %490 = vmatprep.subr.mxu0 0.0
          %491 = vmatpush1.msra.mxu0 %v478
          %492 = vmatprep.subr.mxu0 0.0
          %493 = vmatpush1.msra.mxu0 %v479
          %494 = vmatprep.subr.mxu0 0.0
          %495 = vmatpush1.msra.mxu0 %v480
          %496 = vmatprep.subr.mxu0 0.0
          %497 = vmatpush1.msra.mxu0 %v481
          %498 = vmatprep.subr.mxu0 0.0
          %499 = vmatpush1.msra.mxu0 %v482
          %500 = vmatprep.subr.mxu0 0.0
          %501 = vmatpush1.msra.mxu0 %v483
          %502 = vmatprep.subr.mxu0 0.0
          %503 = vmatpush1.msra.mxu0 %v484
          %504 = vmatprep.subr.mxu0 0.0
          %505 = vmatpush1.msra.mxu0 %v485
          %506 = vmatprep.subr.mxu0 0.0
          %507 = vmatpush1.msra.mxu0 0.0
          %508 = vmatprep.subr.mxu0 0.0
          %509 = vmatpush1.msra.mxu0 0.0
          %510 = vmatprep.subr.mxu0 0.0
          %511 = vmatpush1.msra.mxu0 0.0
          %512 = vmatprep.subr.mxu0 0.0
          %513 = vmatpush1.msra.mxu0 0.0
          %514 = vmatprep.subr.mxu0 0.0
          %515 = vmatpush1.msra.mxu0 0.0
          %516 = vmatprep.subr.mxu0 0.0
          %517 = vmatpush1.msra.mxu0 0.0
          %518 = vmatprep.subr.mxu0 0.0
          %519 = vmatpush1.msra.mxu0 0.0
          %520 = vmatprep.subr.mxu0 0.0
          %521 = vmatpush1.msra.mxu0 0.0
          %522 = vmatprep.subr.mxu0 0.0
          %523 = vmatpush1.msra.mxu0 0.0
          %524 = vmatprep.subr.mxu0 0.0
          %525 = vmatpush1.msra.mxu0 0.0
          %526 = vmatprep.subr.mxu0 0.0
          %527 = vmatpush1.msra.mxu0 0.0
          %528 = vmatprep.subr.mxu0 0.0
          %529 = vmatpush1.msra.mxu0 0.0
          %530 = vmatprep.subr.mxu0 0.0
          %531 = vmatpush1.msra.mxu0 0.0
          %532 = vmatprep.subr.mxu0 0.0
          %533 = vmatpush1.msra.mxu0 0.0
          %534 = vmatprep.subr.mxu0 0.0
          %535 = vmatpush1.msra.mxu0 0.0
          %536 = vmatprep.subr.mxu0 0.0
          %537 = vmatpush1.msra.mxu0 0.0
          %538 = vmatprep.subr.mxu0 0.0
          %539 = vmatpush1.msra.mxu0 0.0
          %540 = vmatprep.subr.mxu0 0.0
          %541 = vmatpush1.msra.mxu0 0.0
          %542 = vmatprep.subr.mxu0 0.0
          %543 = vmatpush1.msra.mxu0 0.0
          %544 = vmatprep.subr.mxu0 0.0
          %545 = vmatpush1.msra.mxu0 0.0
          %546 = vmatprep.subr.mxu0 0.0
          %547 = vmatpush1.msra.mxu0 0.0
          %548 = vmatprep.subr.mxu0 0.0
          %549 = vmatpush1.msra.mxu0 0.0
          %550 = vmatprep.subr.mxu0 0.0
          %551 = vmatpush1.msra.mxu0 0.0
          %552 = vmatprep.subr.mxu0 0.0
          %553 = vmatpush1.msra.mxu0 0.0
          %554 = vmatprep.mubr.f32.mxu0 0.0
          %555 = vmatmul.mubr.f32.gmra.mrb[0].mxu0 %v488
          %v556 = vpop.f32.mrb[0].mxu0
          %v557 = vadd.f32 0.0, %v556
          %v558 = vpop.f32.mrb[0].mxu0
          %559 = vdwg.mxu0
          %v560 = vmax.f32 %v557, 0.0
          %v561 = vld [vmem:[%s2] sm:$0xf]
          %vm562 = vcmask 31744
          %v564 = vsel %vm562, %v560, 0
          %vm566 = vcmask 1043456
          %v568 = vsel %vm566, %v561, 0
          %570 = vmatprep.subr.mxu0 0.0
          %571 = vmatpush1.msra.mxu0 %v568
          %572 = vmatprep.subr.mxu0 0.0
          %573 = vmatpush1.msra.mxu0 0.0
          %574 = vmatprep.subr.mxu0 0.0
          %575 = vmatpush1.msra.mxu0 0.0
          %576 = vmatprep.subr.mxu0 0.0
          %577 = vmatpush1.msra.mxu0 0.0
          %578 = vmatprep.subr.mxu0 0.0
          %579 = vmatpush1.msra.mxu0 0.0
          %580 = vmatprep.subr.mxu0 0.0
          %581 = vmatpush1.msra.mxu0 0.0
          %582 = vmatprep.subr.mxu0 0.0
          %583 = vmatpush1.msra.mxu0 0.0
          %584 = vmatprep.subr.mxu0 0.0
          %585 = vmatpush1.msra.mxu0 0.0
          %586 = vmatprep.subr.mxu0 0.0
          %587 = vmatpush1.msra.mxu0 0.0
          %588 = vmatprep.subr.mxu0 0.0
          %589 = vmatpush1.msra.mxu0 0.0
          %590 = vmatprep.subr.mxu0 0.0
          %591 = vmatpush1.msra.mxu0 0.0
          %592 = vmatprep.subr.mxu0 0.0
          %593 = vmatpush1.msra.mxu0 0.0
          %594 = vmatprep.subr.mxu0 0.0
          %595 = vmatpush1.msra.mxu0 0.0
          %596 = vmatprep.subr.mxu0 0.0
          %597 = vmatpush1.msra.mxu0 0.0
          %598 = vmatprep.subr.mxu0 0.0
          %599 = vmatpush1.msra.mxu0 0.0
          %600 = vmatprep.subr.mxu0 0.0
          %601 = vmatpush1.msra.mxu0 0.0
          %602 = vmatprep.subr.mxu0 0.0
          %603 = vmatpush1.msra.mxu0 0.0
          %604 = vmatprep.subr.mxu0 0.0
          %605 = vmatpush1.msra.mxu0 0.0
          %606 = vmatprep.subr.mxu0 0.0
          %607 = vmatpush1.msra.mxu0 0.0
          %608 = vmatprep.subr.mxu0 0.0
          %609 = vmatpush1.msra.mxu0 0.0
          %610 = vmatprep.subr.mxu0 0.0
          %611 = vmatpush1.msra.mxu0 0.0
          %612 = vmatprep.subr.mxu0 0.0
          %613 = vmatpush1.msra.mxu0 0.0
          %614 = vmatprep.subr.mxu0 0.0
          %615 = vmatpush1.msra.mxu0 0.0
          %616 = vmatprep.subr.mxu0 0.0
          %617 = vmatpush1.msra.mxu0 0.0
          %618 = vmatprep.subr.mxu0 0.0
          %619 = vmatpush1.msra.mxu0 0.0
          %620 = vmatprep.subr.mxu0 0.0
          %621 = vmatpush1.msra.mxu0 0.0
          %622 = vmatprep.subr.mxu0 0.0
          %623 = vmatpush1.msra.mxu0 0.0
          %624 = vmatprep.subr.mxu0 0.0
          %625 = vmatpush1.msra.mxu0 0.0
          %626 = vmatprep.subr.mxu0 0.0
          %627 = vmatpush1.msra.mxu0 0.0
          %628 = vmatprep.subr.mxu0 0.0
          %629 = vmatpush1.msra.mxu0 0.0
          %630 = vmatprep.subr.mxu0 0.0
          %631 = vmatpush1.msra.mxu0 0.0
          %632 = vmatprep.subr.mxu0 0.0
          %633 = vmatpush1.msra.mxu0 0.0
          %634 = vmatprep.mubr.f32.mxu0 0.0
          %635 = vmatmul.mubr.f32.gmra.mrb[0].mxu0 %v564
          %v636 = vpop.f32.mrb[0].mxu0
          %v637 = vadd.f32 0.0, %v636
          %v638 = vpop.f32.mrb[0].mxu0
          %639 = vdwg.mxu0
          %v641 = vrot.slane %v637, 1
          %v643 = vadd.f32 %v637, %v641
          %v644 = vxor.u32 %v643, 2147483648
          %v645 = vmul.f32 %v644, 1.442695
          %v646 = vpow.pop %v645
          %v647 = vadd.f32 %v646, 1.0
          %v648 = vrcp.pop %v647
          %v649 = vmul.f32 1.0, %v648
          %vm650 = vcmask 516096
          %651 = vst.msk [vmem:[%s203] sm:$0x1] %vm650, %v649
        $region44: #{tpu_custom_call.1} parent=31 // pred_fallthru
          _
        %s652 = sand.u32 %s110, 1
        %s653 = scalar_lea.sflag [#allocation6], %s652
        %s654 = sand.u32 %s110, 1
        %s655 = scalar_lea.vmem [#allocation7], %s654
        // Predicated region
        $region45: #{tpu_custom_call.1} parent=31 // pred_check
          %p656 = pneg %p120
        $region46: #{tpu_custom_call.1} parent=31 // pred_check_branch
          %658 = sbr.rel (%p656) target = $region48
        $region47: #{tpu_custom_call.1} parent=31 // pred_region
          %s660 = ssub.s32 16, 16
          %661 = vsyncadd %s653, %s660
          %s662 = smul.addr %s24, 16
          %s663 = scalar_lea.hbm %s3, %s662
          %s665 = sshll.u32 %s655, 4
          %s666 = int_to_ptr.vmem [resolvable:$true] %s665
          %668 = dma.vmem_to_hbm [thread:$0]  %s666, 16, %s663, %s653
        $region48: #{tpu_custom_call.1} parent=31 // pred_fallthru
          _
      $region32: #{tpu_custom_call.1} parent=5 // pred_fallthru
        _
      %p669 = scmp.le.s32.totalorder 2, %s15
      // Predicated region
      $region49: #{tpu_custom_call.1} parent=5 // pred_check
        %p670 = pneg %p669
      $region50: #{tpu_custom_call.1} parent=5 // pred_check_branch
        %672 = sbr.rel (%p670) target = $region52
      $region51: #{tpu_custom_call.1} parent=5 // pred_region
        %s673 = ssub.s32 %s15, 2
        // Predicated region
        $region53: #{tpu_custom_call.1} parent=51 // pred_check
          %p674 = pneg %p126
        $region54: #{tpu_custom_call.1} parent=51 // pred_check_branch
          %676 = sbr.rel (%p674) target = $region56
        $region55: #{tpu_custom_call.1} parent=51 // pred_region
          %s677 = sand.u32 %s111, 1
          %s678 = scalar_lea.sflag [#allocation6], %s677
          %s679 = sand.u32 %s111, 1
          %s680 = scalar_lea.vmem [#allocation7], %s679
          %681 = dma.done %s678, 16
        $region56: #{tpu_custom_call.1} parent=51 // pred_fallthru
          _
      $region52: #{tpu_custom_call.1} parent=5 // pred_fallthru
        _
    $region6: #{tpu_custom_call.1} parent=1 // loop_footer
      %s19 = sadd.s32 1, %s15
    $region7: #{tpu_custom_call.1} parent=1 // loop_footer_branch
      %14 = sbr.rel target = $region3
    $region8: #{tpu_custom_call.1} parent=1 // loop_exit
      _
    %682 = vsyncpa [#allocation5], 1
    %s683 = scalar_lea.sflag [#allocation5], 1
    %684 = vsyncpa %s683, 1
    %685 = vsyncpa [#allocation6], 1
    %s686 = scalar_lea.sflag [#allocation6], 1
    %687 = vsyncpa %s686, 1

</llo_original>
